<compile_context>
chip_gen: v6e
topology: v6e:2x2x1
jax: 0.10.0
libtpu: 0.0.40
codegen_flags: <defaults>
</compile_context>

<pallas_src>
import jax
import jax.numpy as jnp
from jax.experimental import pallas as pl
from jax.experimental.pallas import tpu as pltpu


def _round_up(x: int, m: int) -> int:
    return (x + m - 1) // m * m


def _aggr_sum_kernel(xnode_ref, h_ref, out_ref):
    # xnode_ref: (1, TN)  int32   -- node index per message (this N tile)
    # h_ref:     (TN, TD) H.dtype -- message features (this N x D tile)
    # out_ref:   (TV, TD) float32 -- resident accumulator / output (this V x D tile)
    n_idx = pl.program_id(2)

    @pl.when(n_idx == 0)
    def _():
        out_ref[...] = jnp.zeros_like(out_ref)

    TV = out_ref.shape[0]
    TN = xnode_ref.shape[1]
    v_base = pl.program_id(0) * TV

    xn = xnode_ref[...]                                              # (1, TN) int32
    row_ids = v_base + jax.lax.broadcasted_iota(jnp.int32, (TV, TN), 0)
    # mask[v, n] = (X_node[n] == global_row_v), built in int32, cast for the MXU.
    mask = (xn == row_ids).astype(h_ref.dtype)                       # (TV, TN)

    # Hot path: MXU matmul mask @ H tile, accumulated in f32 directly into the
    # resident output block (same (v, d) block index for every n step).
    out_ref[...] += jnp.dot(mask, h_ref[...],
                            preferred_element_type=jnp.float32)


def aggr_sum(H, X_node, node_num):
    """Pallas equivalent of AggrSum(node_num).forward(H, X_node).

    H:      [N, D] float (kept in its native dtype for the matmul)
    X_node: [N]    integer node index of each row of H
    returns [node_num, D] float32
    """
    N, D = H.shape
    V = int(node_num)

    # Tile sizes: lane-dense D tiles (multiple of 128), sublane-aligned V tiles,
    # 128-aligned contraction tiles. Clamp to the (padded) problem size so tiny
    # test shapes don't over-pad.
    TV = min(256, _round_up(V, 8))
    TD = min(256, _round_up(D, 128))
    TN = min(512, _round_up(N, 128))

    V_pad = _round_up(V, TV)
    D_pad = _round_up(D, TD)
    N_pad = _round_up(N, TN)

    # Pad inputs. Padded X_node entries are -1 -> never match any node row,
    # so padded message rows contribute nothing.
    H_p = jnp.pad(H, ((0, N_pad - N), (0, D_pad - D)))
    x_p = jnp.pad(X_node.astype(jnp.int32), (0, N_pad - N),
                  constant_values=-1).reshape(1, N_pad)

    grid = (V_pad // TV, D_pad // TD, N_pad // TN)

    out = pl.pallas_call(
        _aggr_sum_kernel,
        out_shape=jax.ShapeDtypeStruct((V_pad, D_pad), jnp.float32),
        grid=grid,
        in_specs=[
            # Only the current N-slice of the index row is DMA'd per step.
            pl.BlockSpec((1, TN), lambda v, d, n: (0, n)),
            pl.BlockSpec((TN, TD), lambda v, d, n: (n, d)),
        ],
        # Same block for all n -> output tile stays resident across the
        # reduction axis and doubles as the f32 accumulator.
        out_specs=pl.BlockSpec((TV, TD), lambda v, d, n: (v, d)),
        compiler_params=pltpu.CompilerParams(
            dimension_semantics=("parallel", "parallel", "arbitrary"),
            vmem_limit_bytes=32 * 1024 * 1024,
        ),
    )(x_p, H_p)

    return out[:V, :D]


def aggr_sum_ref(H, X_node, node_num):
    # Pure-JAX reference mirroring the torch code exactly.
    mask = jnp.stack([X_node.astype(jnp.float32)] * node_num, 0)
    mask = mask - jnp.arange(node_num, dtype=jnp.float32)[:, None]
    mask = (mask == 0).astype(jnp.float32)
    return mask @ H


if __name__ == "__main__":
    key = jax.random.PRNGKey(0)
    k_h, k_x = jax.random.split(key)

    V = 16    # node_num
    N = 128   # number of messages / rows of H
    D = 32    # hidden dim

    H = jax.random.normal(k_h, (N, D), dtype=jnp.float32)
    X_node = jax.random.randint(k_x, (N,), 0, V, dtype=jnp.int32)

    out = aggr_sum(H, X_node, V)
    out = jax.block_until_ready(out)

    ref = aggr_sum_ref(H, X_node, V)
    assert out.shape == (V, D)
    assert jnp.allclose(out, ref, atol=1e-5, rtol=1e-5), "mismatch vs reference"

    print("KERNEL_OK")
</pallas_src>

<mosaic_0001>
module attributes {stable_mosaic.version = 11 : i64} {
  func.func @_aggr_sum_kernel(%arg0: i32, %arg1: i32, %arg2: i32, %arg3: memref<1x128xi32, #tpu.memory_space<vmem>>, %arg4: memref<128x128xf32, #tpu.memory_space<vmem>>, %arg5: memref<16x128xf32, #tpu.memory_space<vmem>>) attributes {dimension_semantics = [#tpu.dimension_semantics<parallel>, #tpu.dimension_semantics<parallel>, #tpu.dimension_semantics<arbitrary>], iteration_bounds = array<i64: 1, 1, 1>, scalar_prefetch = 0 : i64, scratch_operands = 0 : i64, tpu.core_type = #tpu.core_type<tc>, window_params = [{transform_indices = @transform_0, window_bounds = array<i64: 1, 128>}, {transform_indices = @transform_1, window_bounds = array<i64: 128, 128>}, {transform_indices = @transform_2, window_bounds = array<i64: 16, 128>}]} {
    %c0_i32 = arith.constant 0 : i32
    %0 = arith.cmpi eq, %arg2, %c0_i32 : i32
    %1 = arith.extui %0 : i1 to i32
    %c0_i32_0 = arith.constant 0 : i32
    %2 = arith.cmpi ne, %1, %c0_i32_0 : i32
    scf.if %2 {
      %cst_8 = arith.constant 0.000000e+00 : f32
      %17 = vector.broadcast %cst_8 : f32 to vector<16x128xf32>
      %c0_9 = arith.constant 0 : index
      %c0_10 = arith.constant 0 : index
      %18 = vector.load %arg5[%c0_9, %c0_10] : memref<16x128xf32, #tpu.memory_space<vmem>>, vector<16x128xf32>
      tpu.vector_store %arg5[%c0_9, %c0_10], %17 {strides = array<i32>} : memref<16x128xf32, #tpu.memory_space<vmem>>, vector<16x128xf32>,
    } else {
    }
    %c16_i32 = arith.constant 16 : i32
    %3 = arith.muli %arg0, %c16_i32 : i32
    %c0 = arith.constant 0 : index
    %c0_1 = arith.constant 0 : index
    %4 = vector.load %arg3[%c0, %c0_1] : memref<1x128xi32, #tpu.memory_space<vmem>>, vector<1x128xi32>
    %5 = tpu.iota {dimensions = array<i32: 0>} : vector<16x128xi32>
    %6 = vector.broadcast %3 : i32 to vector<16x128xi32>
    %7 = arith.addi %6, %5 : vector<16x128xi32>
    %8 = vector.broadcast %4 : vector<1x128xi32> to vector<16x128xi32>
    %9 = arith.cmpi eq, %8, %7 : vector<16x128xi32>
    %10 = arith.extui %9 : vector<16x128xi1> to vector<16x128xi32>
    %11 = arith.sitofp %10 : vector<16x128xi32> to vector<16x128xf32>
    %c0_2 = arith.constant 0 : index
    %c0_3 = arith.constant 0 : index
    %12 = vector.load %arg5[%c0_2, %c0_3] : memref<16x128xf32, #tpu.memory_space<vmem>>, vector<16x128xf32>
    %c0_4 = arith.constant 0 : index
    %c0_5 = arith.constant 0 : index
    %13 = vector.load %arg4[%c0_4, %c0_5] : memref<128x128xf32, #tpu.memory_space<vmem>>, vector<128x128xf32>
    %cst = arith.constant dense<0.000000e+00> : vector<16x128xf32>
    %14 = tpu.matmul %11, %13, %cst {dimension_numbers = #tpu.dot_dimension_numbers<[1], [0], [0], [1], [0, 0, 1, 1], [], []>} : vector<16x128xf32>, vector<128x128xf32>, vector<16x128xf32> -> vector<16x128xf32>
    %15 = arith.addf %12, %14 : vector<16x128xf32>
    %c0_6 = arith.constant 0 : index
    %c0_7 = arith.constant 0 : index
    %16 = vector.load %arg5[%c0_6, %c0_7] : memref<16x128xf32, #tpu.memory_space<vmem>>, vector<16x128xf32>
    tpu.vector_store %arg5[%c0_6, %c0_7], %15 {strides = array<i32>} : memref<16x128xf32, #tpu.memory_space<vmem>>, vector<16x128xf32>,
    return
  }
  func.func @transform_0(%arg0: i32, %arg1: i32, %arg2: i32) -> (i32, i32) {
    %c0_i32 = arith.constant 0 : i32
    %c0_i32_0 = arith.constant 0 : i32
    return %c0_i32, %arg2 : i32, i32
  }
  func.func @transform_1(%arg0: i32, %arg1: i32, %arg2: i32) -> (i32, i32) {
    %c0_i32 = arith.constant 0 : i32
    return %arg2, %arg1 : i32, i32
  }
  func.func @transform_2(%arg0: i32, %arg1: i32, %arg2: i32) -> (i32, i32) {
    %c0_i32 = arith.constant 0 : i32
    return %arg0, %arg1 : i32, i32
  }
}

</mosaic_0001>

<llo_original>
// kernel: tpu_custom_call.1
$region0: #{tpu_custom_call.1}
  #allocation0 [shape = 'u32[]', space=smem, size = 0x4, offset = 0x4, fixed_abs, tag = 'smem constant byte address 0x4 - core index']
  #allocation1 [shape = 'u32[144,128]{1,0:T(1,128)}', space=vmem, size = 0x12000, scoped, tag = 'internal scratch']
  %s0 = inlined_call_operand.hbm [shape: s32[1,128], index: 0, kind: input, shape index: {}]
  %s1 = inlined_call_operand.hbm [shape: f32[128,128], index: 1, kind: input, shape index: {}]
  %s2 = inlined_call_operand.hbm [shape: f32[16,128], index: 2, kind: output, shape index: {}]
  %s3 = sld [smem:[#allocation0]]
  $region30: #{tpu_custom_call.1} parent=0
    _
  %s5 = ssub.s32 1, %s3
  %s6 = scalar_select 0, %s5, %s3
  $region1: #{tpu_custom_call.1} parent=0
    #allocation2 [shape = 'u8[512]{0}', space=vmem, size = 0x400, scoped, tag = 'input window, operand 0, single buffered']
    #allocation3 [shape = 's32[1]{0}', space=sflag, size = 0x4, scoped, tag = 'scoped memory for tpu_custom_call.1']
    #allocation4 [shape = 's32[1]{0}', space=sflag, size = 0x4, scoped, tag = 'scoped memory for tpu_custom_call.1']
    #allocation5 [shape = 'u8[65536]{0}', space=vmem, size = 0x10000, scoped, tag = 'input window, operand 1, single buffered']
    #allocation6 [shape = 's32[1]{0}', space=sflag, size = 0x4, scoped, tag = 'scoped memory for tpu_custom_call.1']
    #allocation7 [shape = 'u8[8192]{0}', space=vmem, size = 0x2000, scoped, tag = 'output window, operand 0, single buffered']
    %7 = vsyncpa [#allocation3], 0
    %8 = vsyncpa [#allocation6], 0
    %9 = vsyncpa [#allocation4], 0
    // Predicated region
    $region2: #{tpu_custom_call.1} parent=1 // pred_check
      _
    $region3: #{tpu_custom_call.1} parent=1 // pred_check_branch
      %11 = sbr.rel (0) target = $region5
    $region4: #{tpu_custom_call.1} parent=1 // pred_region
      %s13 = ssub.s32 16, 16
      %14 = vsyncadd [#allocation3], %s13
      %s16 = sshll.u32 [#allocation2], 4
      %s17 = int_to_ptr.vmem [resolvable:$true] %s16
      %19 = dma.hbm_to_vmem [thread:$0]  %s0, 16, %s17, [#allocation3]
    $region5: #{tpu_custom_call.1} parent=1 // pred_fallthru
      _
    // Predicated region
    $region6: #{tpu_custom_call.1} parent=1 // pred_check
      _
    $region7: #{tpu_custom_call.1} parent=1 // pred_check_branch
      %21 = sbr.rel (0) target = $region9
    $region8: #{tpu_custom_call.1} parent=1 // pred_region
      %s23 = ssub.s32 2048, 2048
      %24 = vsyncadd [#allocation6], %s23
      %s25 = sshll.u32 [#allocation5], 4
      %s26 = int_to_ptr.vmem [resolvable:$true] %s25
      %31 = dma.hbm_to_vmem [thread:$0]  %s1, 2048, %s26, [#allocation6], 128, 128, 8
    $region9: #{tpu_custom_call.1} parent=1 // pred_fallthru
      _
    // Predicated region
    $region10: #{tpu_custom_call.1} parent=1 // pred_check
      _
    $region11: #{tpu_custom_call.1} parent=1 // pred_check_branch
      %33 = sbr.rel (0) target = $region13
    $region12: #{tpu_custom_call.1} parent=1 // pred_region
      %34 = dma.done [#allocation3], 16
    $region13: #{tpu_custom_call.1} parent=1 // pred_fallthru
      _
    // Predicated region
    $region14: #{tpu_custom_call.1} parent=1 // pred_check
      _
    $region15: #{tpu_custom_call.1} parent=1 // pred_check_branch
      %36 = sbr.rel (0) target = $region17
    $region16: #{tpu_custom_call.1} parent=1 // pred_region
      %37 = dma.done [#allocation6], 2048
    $region17: #{tpu_custom_call.1} parent=1 // pred_fallthru
      _
    %p38 = scmp.eq.s32.totalorder 0, 0
    // Predicated region
    $region18: #{tpu_custom_call.1} parent=1 // pred_check
      %p39 = pneg %p38
    $region19: #{tpu_custom_call.1} parent=1 // pred_check_branch
      %41 = sbr.rel (%p39) target = $region21
    $region20: #{tpu_custom_call.1} parent=1 // pred_region
      %42 = vst [vmem:[#allocation7] sm:$0xff] 0.0
      %43 = vst [vmem:[#allocation7 + $0x8] sm:$0xff] 0.0
    $region21: #{tpu_custom_call.1} parent=1 // pred_fallthru
      _
    %s44 = smul.u32 0, 16
    %v45 = vld [vmem:[#allocation2] sm:$0x1]
    %v46 = vlaneseq
    %v47 = vshrl.u32 %v46, 7
    %v48 = vadd.s32 %v47, 8
    %v49 = vstv %s44
    %v50 = vadd.s32 %v49, %v47
    %v51 = vadd.s32 %v49, %v48
    %v52 = vlaneseq
    %v53 = vshrl.u32 %v52, 7
    %v54 = vsub.s32 0, %v53
    %v55 = vrot.slane %v45, %v54
    %vm56 = vcmp.eq.s32.totalorder %v55, %v50
    %vm57 = vcmp.eq.s32.totalorder %v55, %v51
    %v58 = vsel %vm56, 1, 0
    %v59 = vsel %vm57, 1, 0
    %v60 = vcvt.s32.f32 %v58
    %v61 = vcvt.s32.f32 %v59
    %v62 = vld [vmem:[#allocation7] sm:$0xff]
    %v63 = vld [vmem:[#allocation7 + $0x8] sm:$0xff]
    %v64 = vld [vmem:[#allocation5] sm:$0xff]
    %v65 = vld [vmem:[#allocation5 + $0x8] sm:$0xff]
    %v66 = vld [vmem:[#allocation5 + $0x10] sm:$0xff]
    %v67 = vld [vmem:[#allocation5 + $0x18] sm:$0xff]
    %v68 = vld [vmem:[#allocation5 + $0x20] sm:$0xff]
    %v69 = vld [vmem:[#allocation5 + $0x28] sm:$0xff]
    %v70 = vld [vmem:[#allocation5 + $0x30] sm:$0xff]
    %v71 = vld [vmem:[#allocation5 + $0x38] sm:$0xff]
    %v72 = vld [vmem:[#allocation5 + $0x40] sm:$0xff]
    %v73 = vld [vmem:[#allocation5 + $0x48] sm:$0xff]
    %v74 = vld [vmem:[#allocation5 + $0x50] sm:$0xff]
    %v75 = vld [vmem:[#allocation5 + $0x58] sm:$0xff]
    %v76 = vld [vmem:[#allocation5 + $0x60] sm:$0xff]
    %v77 = vld [vmem:[#allocation5 + $0x68] sm:$0xff]
    %v78 = vld [vmem:[#allocation5 + $0x70] sm:$0xff]
    %v79 = vld [vmem:[#allocation5 + $0x78] sm:$0xff]
    %80 = vmatprep.subr.mxu0 0.0
    %81 = vmatpush1.msra.mxu0 %v79
    %82 = vmatprep.subr.mxu0 0.0
    %83 = vmatpush1.msra.mxu0 %v78
    %84 = vmatprep.subr.mxu0 0.0
    %85 = vmatpush1.msra.mxu0 %v77
    %86 = vmatprep.subr.mxu0 0.0
    %87 = vmatpush1.msra.mxu0 %v76
    %88 = vmatprep.subr.mxu0 0.0
    %89 = vmatpush1.msra.mxu0 %v75
    %90 = vmatprep.subr.mxu0 0.0
    %91 = vmatpush1.msra.mxu0 %v74
    %92 = vmatprep.subr.mxu0 0.0
    %93 = vmatpush1.msra.mxu0 %v73
    %94 = vmatprep.subr.mxu0 0.0
    %95 = vmatpush1.msra.mxu0 %v72
    %96 = vmatprep.subr.mxu0 0.0
    %97 = vmatpush1.msra.mxu0 %v71
    %98 = vmatprep.subr.mxu0 0.0
    %99 = vmatpush1.msra.mxu0 %v70
    %100 = vmatprep.subr.mxu0 0.0
    %101 = vmatpush1.msra.mxu0 %v69
    %102 = vmatprep.subr.mxu0 0.0
    %103 = vmatpush1.msra.mxu0 %v68
    %104 = vmatprep.subr.mxu0 0.0
    %105 = vmatpush1.msra.mxu0 %v67
    %106 = vmatprep.subr.mxu0 0.0
    %107 = vmatpush1.msra.mxu0 %v66
    %108 = vmatprep.subr.mxu0 0.0
    %109 = vmatpush1.msra.mxu0 %v65
    %110 = vmatprep.subr.mxu0 0.0
    %111 = vmatpush1.msra.mxu0 %v64
    %112 = vmatprep.subr.mxu0 0.0
    %113 = vmatpush2.msra.mxu0 0.0
    %114 = vmatprep.subr.mxu0 0.0
    %115 = vmatpush2.msra.mxu0 0.0
    %116 = vmatprep.subr.mxu0 0.0
    %117 = vmatpush2.msra.mxu0 0.0
    %118 = vmatprep.subr.mxu0 0.0
    %119 = vmatpush2.msra.mxu0 0.0
    %120 = vmatprep.subr.mxu0 0.0
    %121 = vmatpush2.msra.mxu0 0.0
    %122 = vmatprep.subr.mxu0 0.0
    %123 = vmatpush2.msra.mxu0 0.0
    %124 = vmatprep.subr.mxu0 0.0
    %125 = vmatpush2.msra.mxu0 0.0
    %126 = vmatprep.subr.mxu0 0.0
    %127 = vmatpush2.msra.mxu0 0.0
    %128 = vmatprep.subr.mxu0 0.0
    %129 = vmatpush2.msra.mxu0 0.0
    %130 = vmatprep.subr.mxu0 0.0
    %131 = vmatpush2.msra.mxu0 0.0
    %132 = vmatprep.subr.mxu0 0.0
    %133 = vmatpush2.msra.mxu0 0.0
    %134 = vmatprep.subr.mxu0 0.0
    %135 = vmatpush2.msra.mxu0 0.0
    %136 = vmatprep.subr.mxu0 0.0
    %137 = vmatpush2.msra.mxu0 0.0
    %138 = vmatprep.subr.mxu0 0.0
    %139 = vmatpush2.msra.mxu0 0.0
    %140 = vmatprep.subr.mxu0 0.0
    %141 = vmatpush2.msra.mxu0 0.0
    %142 = vmatprep.subr.mxu0 0.0
    %143 = vmatpush2.msra.mxu0 0.0
    %144 = vmatprep.mubr.f32.mxu0 0.0
    %145 = vmatmul.mubr.f32.gmra.mxu0 %v60
    %v146 = vpop.f32.mrf.mxu0
    %v147 = vadd.f32 0.0, %v146
    %v148 = vpop.f32.mrf.mxu0
    %149 = vmatprep.mubr.f32.mxu0 0.0
    %150 = vmatmul.mubr.f32.gmra.mxu0 %v61
    %v151 = vpop.f32.mrf.mxu0
    %v152 = vadd.f32 0.0, %v151
    %v153 = vpop.f32.mrf.mxu0
    %154 = vdwg.mxu0
    %v155 = vadd.f32 %v62, %v147
    %v156 = vadd.f32 %v63, %v152
    %157 = vst [vmem:[#allocation7] sm:$0xff] %v155
    %158 = vst [vmem:[#allocation7 + $0x8] sm:$0xff] %v156
    // Predicated region
    $region22: #{tpu_custom_call.1} parent=1 // pred_check
      _
    $region23: #{tpu_custom_call.1} parent=1 // pred_check_branch
      %160 = sbr.rel (0) target = $region25
    $region24: #{tpu_custom_call.1} parent=1 // pred_region
      %s162 = ssub.s32 256, 256
      %163 = vsyncadd [#allocation4], %s162
      %s164 = sshll.u32 [#allocation7], 4
      %s165 = int_to_ptr.vmem [resolvable:$true] %s164
      %170 = dma.vmem_to_hbm [thread:$0]  %s165, 256, %s2, [#allocation4], 128, 128, 8
    $region25: #{tpu_custom_call.1} parent=1 // pred_fallthru
      _
    // Predicated region
    $region26: #{tpu_custom_call.1} parent=1 // pred_check
      _
    $region27: #{tpu_custom_call.1} parent=1 // pred_check_branch
      %172 = sbr.rel (0) target = $region29
    $region28: #{tpu_custom_call.1} parent=1 // pred_region
      %173 = dma.done [#allocation4], 256
    $region29: #{tpu_custom_call.1} parent=1 // pred_fallthru
      _
    %174 = vsyncpa [#allocation3], 1
    %175 = vsyncpa [#allocation6], 1
    %176 = vsyncpa [#allocation4], 1

</llo_original>
